<compile_context>
chip_gen: v7x
topology: tpu7x:2x2x1
jax: 0.10.0
libtpu: 0.0.40
codegen_flags: <defaults>
</compile_context>

<pallas_src>
import functools

import jax
import jax.numpy as jnp
from jax.experimental import pallas as pl
from jax.experimental.pallas import tpu as pltpu


def _round_up(a, b):
    return (a + b - 1) // b * b


def _dice_partial_kernel(x_ref, t_ref, i_ref, y_ref, z_ref, *,
                         n_classes, do_softmax, s_tile, hw_valid,
                         mask_needed):
    """Accumulates per-image, per-class partial sums.

    x_ref: (C, s_tile, 128) logits/probs (native dtype)
    t_ref: (s_tile, 128) int32 labels
    i_ref/y_ref/z_ref: (C, 1, 128) f32 partial sums, resident across the h axis.
    """
    h = pl.program_id(1)

    @pl.when(h == 0)
    def _():
        i_ref[...] = jnp.zeros_like(i_ref)
        y_ref[...] = jnp.zeros_like(y_ref)
        z_ref[...] = jnp.zeros_like(z_ref)

    x = x_ref[...].astype(jnp.float32)            # (C, s_tile, 128)
    t = t_ref[...]                                # (s_tile, 128) int32

    if do_softmax:
        mx = jnp.max(x, axis=0, keepdims=True)
        e = jnp.exp(x - mx)
        denom = jnp.sum(e, axis=0, keepdims=True)
        x = e * pl.reciprocal(denom)              # 1 reciprocal (EUP) + C muls

    def _accumulate(valid):
        # Unrolled over the (small, static) class axis: scalar-constant label
        # compares, no per-step iota, all ops on full (s_tile, 128) vregs.
        for c in range(n_classes):
            xc = x[c]                             # (s_tile, 128)
            match = t == c
            z_term = xc * xc
            if valid is not None:
                match = jnp.logical_and(match, valid)
                z_term = jnp.where(valid, z_term, 0.0)
            i_ref[c] += jnp.sum(jnp.where(match, xc, 0.0),
                                axis=0, keepdims=True)        # (1, 128)
            y_ref[c] += jnp.sum(match.astype(jnp.float32),
                                axis=0, keepdims=True)
            z_ref[c] += jnp.sum(z_term, axis=0, keepdims=True)

    if mask_needed:
        nh = pl.num_programs(1)

        @pl.when(h < nh - 1)
        def _():
            _accumulate(None)                     # fast path: full tiles

        @pl.when(h == nh - 1)
        def _():
            # Only the ragged last block pays for the validity mask.
            row = jax.lax.broadcasted_iota(jnp.int32, (s_tile, 128), 0)
            lane = jax.lax.broadcasted_iota(jnp.int32, (s_tile, 128), 1)
            flat = (h * s_tile + row) * 128 + lane
            _accumulate(flat < hw_valid)
    else:
        _accumulate(None)


def dice_loss(inputs, target, n_classes, weight=None, softmax=False,
              s_tile=None):
    """inputs: [N, C, H, W] float (f32 or bf16); target: [N, H, W] int labels."""
    N, C, H, W = inputs.shape
    assert C == n_classes
    HW = H * W
    HW_pad = _round_up(HW, 128)

    x = inputs.reshape(N, C, HW)
    t = target.reshape(N, HW)
    if t.dtype != jnp.int32:
        t = t.astype(jnp.int32)

    if HW_pad != HW:
        # Rare (HW % 128 != 0): pad so the spatial axis packs into whole
        # 128-lane rows; padded columns are neutralized by the in-kernel mask.
        x = jnp.pad(x, ((0, 0), (0, 0), (0, HW_pad - HW)))
        t = jnp.pad(t, ((0, 0), (0, HW_pad - HW)))

    S = HW_pad // 128
    x = x.reshape(N, C, S, 128)     # free, row-major: sublane-packed layout
    t = t.reshape(N, S, 128)

    # --- tile selection, budgeted against the actual chip's VMEM ------------
    try:
        info = pltpu.get_tpu_info()
        vmem_cap = int(getattr(info, "vmem_capacity_bytes", 64 * 1024 * 1024))
    except Exception:
        vmem_cap = 64 * 1024 * 1024            # conservative (v7x) fallback
    vmem_limit = max(32 * 1024 * 1024,
                     min(vmem_cap * 3 // 4, 96 * 1024 * 1024))
    budget = vmem_limit // 2                   # leave headroom for temporaries

    bytes_x = jnp.dtype(inputs.dtype).itemsize
    per_row = 128 * (2 * C * bytes_x + 2 * 4)  # x + label double-buffers / row

    if S < 8:
        s_tile = S                             # block == full dim (allowed)
    else:
        if s_tile is None:
            cap = max(8, (min(1024, budget // per_row) // 8) * 8)
            s_tile = min(cap, (S // 8) * 8)
        else:
            s_tile = max(8, (min(int(s_tile), S) // 8) * 8)

    grid_h = pl.cdiv(S, s_tile)
    mask_needed = (HW_pad != HW) or (S % s_tile != 0)

    kernel = functools.partial(
        _dice_partial_kernel,
        n_classes=C, do_softmax=softmax, s_tile=s_tile,
        hw_valid=HW, mask_needed=mask_needed)

    part_shape = jax.ShapeDtypeStruct((N, C, 1, 128), jnp.float32)
    part_spec = pl.BlockSpec((None, C, 1, 128), lambda n, h: (n, 0, 0, 0))

    i_part, y_part, z_part = pl.pallas_call(
        kernel,
        out_shape=(part_shape, part_shape, part_shape),
        grid_spec=pltpu.PrefetchScalarGridSpec(
            num_scalar_prefetch=0,
            grid=(N, grid_h),
            in_specs=[
                pl.BlockSpec((None, C, s_tile, 128),
                             lambda n, h: (n, 0, h, 0)),
                pl.BlockSpec((None, s_tile, 128),
                             lambda n, h: (n, h, 0)),
            ],
            out_specs=(part_spec, part_spec, part_spec),
        ),
        compiler_params=pltpu.CompilerParams(
            dimension_semantics=("parallel", "arbitrary"),
            vmem_limit_bytes=vmem_limit),
    )(x, t)

    # Tiny final combine in plain JAX (dice formula, class weights, mean).
    if weight is None:
        weight = [1.0] * n_classes
    w = jnp.asarray(weight, jnp.float32)
    smooth = 1e-05
    intersect = jnp.sum(i_part, axis=(0, 2, 3))          # (C,)
    y_sum = jnp.sum(y_part, axis=(0, 2, 3))
    z_sum = jnp.sum(z_part, axis=(0, 2, 3))
    dice = (2.0 * intersect + smooth) / (z_sum + y_sum + smooth)
    loss = jnp.sum((1.0 - dice) * w) / n_classes
    return loss


def _ref_dice_loss(inputs, target, n_classes, weight=None, softmax=False):
    """Pure-JAX reference mirroring the PyTorch module."""
    if softmax:
        inputs = jax.nn.softmax(inputs, axis=1)
    onehot = jax.nn.one_hot(target, n_classes, axis=1, dtype=jnp.float32)
    if weight is None:
        weight = [1.0] * n_classes
    smooth = 1e-05
    loss = 0.0
    for i in range(n_classes):
        score = inputs[:, i]
        tgt = onehot[:, i]
        intersect = jnp.sum(score * tgt)
        y_sum = jnp.sum(tgt * tgt)
        z_sum = jnp.sum(score * score)
        dice = 1.0 - (2.0 * intersect + smooth) / (z_sum + y_sum + smooth)
        loss = loss + dice * weight[i]
    return loss / n_classes


if __name__ == "__main__":
    n_classes = 4
    N, H, W = 2, 16, 16

    key = jax.random.PRNGKey(0)
    k1, k2 = jax.random.split(key)
    logits = jax.random.normal(k1, (N, n_classes, H, W), dtype=jnp.float32)
    labels = jax.random.randint(k2, (N, H, W), 0, n_classes, dtype=jnp.int32)

    # with softmax=True (typical training usage)
    out_sm = jax.block_until_ready(
        dice_loss(logits, labels, n_classes, softmax=True))
    ref_sm = _ref_dice_loss(logits, labels, n_classes, softmax=True)

    # without softmax (already-probability inputs), with class weights
    probs = jax.nn.softmax(logits, axis=1)
    wts = [1.0, 0.5, 2.0, 1.5]
    out_ns = jax.block_until_ready(
        dice_loss(probs, labels, n_classes, weight=wts, softmax=False))
    ref_ns = _ref_dice_loss(probs, labels, n_classes, weight=wts, softmax=False)

    # ragged spatial size (HW % 128 != 0) + bf16 inputs: exercises the masked
    # last-block path and the native-dtype streaming.
    H2, W2 = 20, 20
    logits2 = jax.random.normal(k1, (N, n_classes, H2, W2), dtype=jnp.bfloat16)
    labels2 = jax.random.randint(k2, (N, H2, W2), 0, n_classes, dtype=jnp.int32)
    out_rg = jax.block_until_ready(
        dice_loss(logits2, labels2, n_classes, softmax=True))
    ref_rg = _ref_dice_loss(logits2.astype(jnp.float32), labels2, n_classes,
                            softmax=True)

    assert jnp.allclose(out_sm, ref_sm, rtol=1e-5, atol=1e-6), (out_sm, ref_sm)
    assert jnp.allclose(out_ns, ref_ns, rtol=1e-5, atol=1e-6), (out_ns, ref_ns)
    assert jnp.allclose(out_rg, ref_rg, rtol=1e-3, atol=1e-4), (out_rg, ref_rg)

    print("KERNEL_OK")
</pallas_src>

<mosaic_0001>
module attributes {stable_mosaic.version = 11 : i64} {
  func.func @_dice_partial_kernel(%arg0: i32, %arg1: i32, %arg2: memref<1x4x2x128xf32, #tpu.memory_space<vmem>>, %arg3: memref<1x2x128xi32, #tpu.memory_space<vmem>>, %arg4: memref<1x4x1x128xf32, #tpu.memory_space<vmem>>, %arg5: memref<1x4x1x128xf32, #tpu.memory_space<vmem>>, %arg6: memref<1x4x1x128xf32, #tpu.memory_space<vmem>>) attributes {dimension_semantics = [#tpu.dimension_semantics<parallel>, #tpu.dimension_semantics<arbitrary>], iteration_bounds = array<i64: 2, 1>, scalar_prefetch = 0 : i64, scratch_operands = 0 : i64, tpu.core_type = #tpu.core_type<tc>, window_params = [{transform_indices = @transform_0, window_bounds = array<i64: 1, 4, 2, 128>}, {transform_indices = @transform_1, window_bounds = array<i64: 1, 2, 128>}, {transform_indices = @transform_2, window_bounds = array<i64: 1, 4, 1, 128>}, {transform_indices = @transform_3, window_bounds = array<i64: 1, 4, 1, 128>}, {transform_indices = @transform_4, window_bounds = array<i64: 1, 4, 1, 128>}]} {
    %c0_i32 = arith.constant 0 : i32
    %0 = arith.cmpi eq, %arg1, %c0_i32 : i32
    %1 = arith.extui %0 : i1 to i32
    %c0_i32_0 = arith.constant 0 : i32
    %2 = arith.cmpi ne, %1, %c0_i32_0 : i32
    scf.if %2 {
      %cst_118 = arith.constant 0.000000e+00 : f32
      %149 = vector.broadcast %cst_118 : f32 to vector<4x1x128xf32>
      %c0_119 = arith.constant 0 : index
      %c0_120 = arith.constant 0 : index
      %c0_121 = arith.constant 0 : index
      %c0_122 = arith.constant 0 : index
      %150 = vector.load %arg4[%c0_119, %c0_120, %c0_121, %c0_122] : memref<1x4x1x128xf32, #tpu.memory_space<vmem>>, vector<1x4x1x128xf32>
      %151 = vector.shape_cast %150 : vector<1x4x1x128xf32> to vector<4x1x128xf32>
      %152 = vector.shape_cast %149 : vector<4x1x128xf32> to vector<1x4x1x128xf32>
      tpu.vector_store %arg4[%c0_119, %c0_120, %c0_121, %c0_122], %152 {strides = array<i32>} : memref<1x4x1x128xf32, #tpu.memory_space<vmem>>, vector<1x4x1x128xf32>,
      %cst_123 = arith.constant 0.000000e+00 : f32
      %153 = vector.broadcast %cst_123 : f32 to vector<4x1x128xf32>
      %c0_124 = arith.constant 0 : index
      %c0_125 = arith.constant 0 : index
      %c0_126 = arith.constant 0 : index
      %c0_127 = arith.constant 0 : index
      %154 = vector.load %arg5[%c0_124, %c0_125, %c0_126, %c0_127] : memref<1x4x1x128xf32, #tpu.memory_space<vmem>>, vector<1x4x1x128xf32>
      %155 = vector.shape_cast %154 : vector<1x4x1x128xf32> to vector<4x1x128xf32>
      %156 = vector.shape_cast %153 : vector<4x1x128xf32> to vector<1x4x1x128xf32>
      tpu.vector_store %arg5[%c0_124, %c0_125, %c0_126, %c0_127], %156 {strides = array<i32>} : memref<1x4x1x128xf32, #tpu.memory_space<vmem>>, vector<1x4x1x128xf32>,
      %cst_128 = arith.constant 0.000000e+00 : f32
      %157 = vector.broadcast %cst_128 : f32 to vector<4x1x128xf32>
      %c0_129 = arith.constant 0 : index
      %c0_130 = arith.constant 0 : index
      %c0_131 = arith.constant 0 : index
      %c0_132 = arith.constant 0 : index
      %158 = vector.load %arg6[%c0_129, %c0_130, %c0_131, %c0_132] : memref<1x4x1x128xf32, #tpu.memory_space<vmem>>, vector<1x4x1x128xf32>
      %159 = vector.shape_cast %158 : vector<1x4x1x128xf32> to vector<4x1x128xf32>
      %160 = vector.shape_cast %157 : vector<4x1x128xf32> to vector<1x4x1x128xf32>
      tpu.vector_store %arg6[%c0_129, %c0_130, %c0_131, %c0_132], %160 {strides = array<i32>} : memref<1x4x1x128xf32, #tpu.memory_space<vmem>>, vector<1x4x1x128xf32>,
    } else {
    }
    %c0 = arith.constant 0 : index
    %c0_1 = arith.constant 0 : index
    %c0_2 = arith.constant 0 : index
    %c0_3 = arith.constant 0 : index
    %3 = vector.load %arg2[%c0, %c0_1, %c0_2, %c0_3] : memref<1x4x2x128xf32, #tpu.memory_space<vmem>>, vector<1x4x2x128xf32>
    %4 = vector.shape_cast %3 : vector<1x4x2x128xf32> to vector<4x2x128xf32>
    %c0_4 = arith.constant 0 : index
    %c0_5 = arith.constant 0 : index
    %c0_6 = arith.constant 0 : index
    %5 = vector.load %arg3[%c0_4, %c0_5, %c0_6] : memref<1x2x128xi32, #tpu.memory_space<vmem>>, vector<1x2x128xi32>
    %6 = vector.shape_cast %5 : vector<1x2x128xi32> to vector<2x128xi32>
    %cst = arith.constant dense<0xFF800000> : vector<2x128xf32>
    %7 = vector.multi_reduction <maximumf>, %4, %cst [0] : vector<4x2x128xf32> to vector<2x128xf32>
    %8 = vector.shape_cast %7 : vector<2x128xf32> to vector<1x2x128xf32>
    %9 = vector.broadcast %8 : vector<1x2x128xf32> to vector<4x2x128xf32>
    %10 = arith.subf %4, %9 : vector<4x2x128xf32>
    %11 = math.exp %10 : vector<4x2x128xf32>
    %cst_7 = arith.constant dense<0.000000e+00> : vector<2x128xf32>
    %12 = vector.multi_reduction <add>, %11, %cst_7 [0] : vector<4x2x128xf32> to vector<2x128xf32>
    %13 = vector.shape_cast %12 : vector<2x128xf32> to vector<1x2x128xf32>
    %14 = tpu.reciprocal %13 : vector<1x2x128xf32> -> vector<1x2x128xf32>
    %15 = vector.broadcast %14 : vector<1x2x128xf32> to vector<4x2x128xf32>
    %16 = arith.mulf %11, %15 : vector<4x2x128xf32>
    %17 = vector.extract_strided_slice %16 {offsets = [0, 0, 0], sizes = [1, 2, 128], strides = [1, 1, 1]} : vector<4x2x128xf32> to vector<1x2x128xf32>
    %18 = vector.shape_cast %17 : vector<1x2x128xf32> to vector<2x128xf32>
    %c0_i32_8 = arith.constant 0 : i32
    %19 = vector.broadcast %c0_i32_8 : i32 to vector<2x128xi32>
    %20 = arith.cmpi eq, %6, %19 : vector<2x128xi32>
    %21 = arith.mulf %18, %18 : vector<2x128xf32>
    %c0_9 = arith.constant 0 : index
    %c0_10 = arith.constant 0 : index
    %c0_11 = arith.constant 0 : index
    %c0_12 = arith.constant 0 : index
    %22 = vector.load %arg4[%c0_9, %c0_10, %c0_11, %c0_12] : memref<1x4x1x128xf32, #tpu.memory_space<vmem>>, vector<1x1x1x128xf32>
    %23 = vector.shape_cast %22 : vector<1x1x1x128xf32> to vector<1x128xf32>
    %cst_13 = arith.constant 0.000000e+00 : f32
    %24 = vector.broadcast %cst_13 : f32 to vector<2x128xf32>
    %25 = arith.select %20, %18, %24 : vector<2x128xi1>, vector<2x128xf32>
    %cst_14 = arith.constant dense<0.000000e+00> : vector<128xf32>
    %26 = vector.multi_reduction <add>, %25, %cst_14 [0] : vector<2x128xf32> to vector<128xf32>
    %27 = vector.shape_cast %26 : vector<128xf32> to vector<1x128xf32>
    %28 = arith.addf %23, %27 : vector<1x128xf32>
    %c0_15 = arith.constant 0 : index
    %c0_16 = arith.constant 0 : index
    %c0_17 = arith.constant 0 : index
    %c0_18 = arith.constant 0 : index
    %29 = vector.load %arg4[%c0_15, %c0_16, %c0_17, %c0_18] : memref<1x4x1x128xf32, #tpu.memory_space<vmem>>, vector<1x1x1x128xf32>
    %30 = vector.shape_cast %29 : vector<1x1x1x128xf32> to vector<1x128xf32>
    %31 = vector.shape_cast %28 : vector<1x128xf32> to vector<1x1x1x128xf32>
    tpu.vector_store %arg4[%c0_15, %c0_16, %c0_17, %c0_18], %31 {strides = array<i32>} : memref<1x4x1x128xf32, #tpu.memory_space<vmem>>, vector<1x1x1x128xf32>,
    %c0_19 = arith.constant 0 : index
    %c0_20 = arith.constant 0 : index
    %c0_21 = arith.constant 0 : index
    %c0_22 = arith.constant 0 : index
    %32 = vector.load %arg5[%c0_19, %c0_20, %c0_21, %c0_22] : memref<1x4x1x128xf32, #tpu.memory_space<vmem>>, vector<1x1x1x128xf32>
    %33 = vector.shape_cast %32 : vector<1x1x1x128xf32> to vector<1x128xf32>
    %34 = arith.extui %20 : vector<2x128xi1> to vector<2x128xi32>
    %35 = arith.sitofp %34 : vector<2x128xi32> to vector<2x128xf32>
    %cst_23 = arith.constant dense<0.000000e+00> : vector<128xf32>
    %36 = vector.multi_reduction <add>, %35, %cst_23 [0] : vector<2x128xf32> to vector<128xf32>
    %37 = vector.shape_cast %36 : vector<128xf32> to vector<1x128xf32>
    %38 = arith.addf %33, %37 : vector<1x128xf32>
    %c0_24 = arith.constant 0 : index
    %c0_25 = arith.constant 0 : index
    %c0_26 = arith.constant 0 : index
    %c0_27 = arith.constant 0 : index
    %39 = vector.load %arg5[%c0_24, %c0_25, %c0_26, %c0_27] : memref<1x4x1x128xf32, #tpu.memory_space<vmem>>, vector<1x1x1x128xf32>
    %40 = vector.shape_cast %39 : vector<1x1x1x128xf32> to vector<1x128xf32>
    %41 = vector.shape_cast %38 : vector<1x128xf32> to vector<1x1x1x128xf32>
    tpu.vector_store %arg5[%c0_24, %c0_25, %c0_26, %c0_27], %41 {strides = array<i32>} : memref<1x4x1x128xf32, #tpu.memory_space<vmem>>, vector<1x1x1x128xf32>,
    %c0_28 = arith.constant 0 : index
    %c0_29 = arith.constant 0 : index
    %c0_30 = arith.constant 0 : index
    %c0_31 = arith.constant 0 : index
    %42 = vector.load %arg6[%c0_28, %c0_29, %c0_30, %c0_31] : memref<1x4x1x128xf32, #tpu.memory_space<vmem>>, vector<1x1x1x128xf32>
    %43 = vector.shape_cast %42 : vector<1x1x1x128xf32> to vector<1x128xf32>
    %cst_32 = arith.constant dense<0.000000e+00> : vector<128xf32>
    %44 = vector.multi_reduction <add>, %21, %cst_32 [0] : vector<2x128xf32> to vector<128xf32>
    %45 = vector.shape_cast %44 : vector<128xf32> to vector<1x128xf32>
    %46 = arith.addf %43, %45 : vector<1x128xf32>
    %c0_33 = arith.constant 0 : index
    %c0_34 = arith.constant 0 : index
    %c0_35 = arith.constant 0 : index
    %c0_36 = arith.constant 0 : index
    %47 = vector.load %arg6[%c0_33, %c0_34, %c0_35, %c0_36] : memref<1x4x1x128xf32, #tpu.memory_space<vmem>>, vector<1x1x1x128xf32>
    %48 = vector.shape_cast %47 : vector<1x1x1x128xf32> to vector<1x128xf32>
    %49 = vector.shape_cast %46 : vector<1x128xf32> to vector<1x1x1x128xf32>
    tpu.vector_store %arg6[%c0_33, %c0_34, %c0_35, %c0_36], %49 {strides = array<i32>} : memref<1x4x1x128xf32, #tpu.memory_space<vmem>>, vector<1x1x1x128xf32>,
    %50 = vector.extract_strided_slice %16 {offsets = [1, 0, 0], sizes = [1, 2, 128], strides = [1, 1, 1]} : vector<4x2x128xf32> to vector<1x2x128xf32>
    %51 = vector.shape_cast %50 : vector<1x2x128xf32> to vector<2x128xf32>
    %c1_i32 = arith.constant 1 : i32
    %52 = vector.broadcast %c1_i32 : i32 to vector<2x128xi32>
    %53 = arith.cmpi eq, %6, %52 : vector<2x128xi32>
    %54 = arith.mulf %51, %51 : vector<2x128xf32>
    %c0_37 = arith.constant 0 : index
    %c1 = arith.constant 1 : index
    %c0_38 = arith.constant 0 : index
    %c0_39 = arith.constant 0 : index
    %55 = vector.load %arg4[%c0_37, %c1, %c0_38, %c0_39] : memref<1x4x1x128xf32, #tpu.memory_space<vmem>>, vector<1x1x1x128xf32>
    %56 = vector.shape_cast %55 : vector<1x1x1x128xf32> to vector<1x128xf32>
    %cst_40 = arith.constant 0.000000e+00 : f32
    %57 = vector.broadcast %cst_40 : f32 to vector<2x128xf32>
    %58 = arith.select %53, %51, %57 : vector<2x128xi1>, vector<2x128xf32>
    %cst_41 = arith.constant dense<0.000000e+00> : vector<128xf32>
    %59 = vector.multi_reduction <add>, %58, %cst_41 [0] : vector<2x128xf32> to vector<128xf32>
    %60 = vector.shape_cast %59 : vector<128xf32> to vector<1x128xf32>
    %61 = arith.addf %56, %60 : vector<1x128xf32>
    %c0_42 = arith.constant 0 : index
    %c1_43 = arith.constant 1 : index
    %c0_44 = arith.constant 0 : index
    %c0_45 = arith.constant 0 : index
    %62 = vector.load %arg4[%c0_42, %c1_43, %c0_44, %c0_45] : memref<1x4x1x128xf32, #tpu.memory_space<vmem>>, vector<1x1x1x128xf32>
    %63 = vector.shape_cast %62 : vector<1x1x1x128xf32> to vector<1x128xf32>
    %64 = vector.shape_cast %61 : vector<1x128xf32> to vector<1x1x1x128xf32>
    tpu.vector_store %arg4[%c0_42, %c1_43, %c0_44, %c0_45], %64 {strides = array<i32>} : memref<1x4x1x128xf32, #tpu.memory_space<vmem>>, vector<1x1x1x128xf32>,
    %c0_46 = arith.constant 0 : index
    %c1_47 = arith.constant 1 : index
    %c0_48 = arith.constant 0 : index
    %c0_49 = arith.constant 0 : index
    %65 = vector.load %arg5[%c0_46, %c1_47, %c0_48, %c0_49] : memref<1x4x1x128xf32, #tpu.memory_space<vmem>>, vector<1x1x1x128xf32>
    %66 = vector.shape_cast %65 : vector<1x1x1x128xf32> to vector<1x128xf32>
    %67 = arith.extui %53 : vector<2x128xi1> to vector<2x128xi32>
    %68 = arith.sitofp %67 : vector<2x128xi32> to vector<2x128xf32>
    %cst_50 = arith.constant dense<0.000000e+00> : vector<128xf32>
    %69 = vector.multi_reduction <add>, %68, %cst_50 [0] : vector<2x128xf32> to vector<128xf32>
    %70 = vector.shape_cast %69 : vector<128xf32> to vector<1x128xf32>
    %71 = arith.addf %66, %70 : vector<1x128xf32>
    %c0_51 = arith.constant 0 : index
    %c1_52 = arith.constant 1 : index
    %c0_53 = arith.constant 0 : index
    %c0_54 = arith.constant 0 : index
    %72 = vector.load %arg5[%c0_51, %c1_52, %c0_53, %c0_54] : memref<1x4x1x128xf32, #tpu.memory_space<vmem>>, vector<1x1x1x128xf32>
    %73 = vector.shape_cast %72 : vector<1x1x1x128xf32> to vector<1x128xf32>
    %74 = vector.shape_cast %71 : vector<1x128xf32> to vector<1x1x1x128xf32>
    tpu.vector_store %arg5[%c0_51, %c1_52, %c0_53, %c0_54], %74 {strides = array<i32>} : memref<1x4x1x128xf32, #tpu.memory_space<vmem>>, vector<1x1x1x128xf32>,
    %c0_55 = arith.constant 0 : index
    %c1_56 = arith.constant 1 : index
    %c0_57 = arith.constant 0 : index
    %c0_58 = arith.constant 0 : index
    %75 = vector.load %arg6[%c0_55, %c1_56, %c0_57, %c0_58] : memref<1x4x1x128xf32, #tpu.memory_space<vmem>>, vector<1x1x1x128xf32>
    %76 = vector.shape_cast %75 : vector<1x1x1x128xf32> to vector<1x128xf32>
    %cst_59 = arith.constant dense<0.000000e+00> : vector<128xf32>
    %77 = vector.multi_reduction <add>, %54, %cst_59 [0] : vector<2x128xf32> to vector<128xf32>
    %78 = vector.shape_cast %77 : vector<128xf32> to vector<1x128xf32>
    %79 = arith.addf %76, %78 : vector<1x128xf32>
    %c0_60 = arith.constant 0 : index
    %c1_61 = arith.constant 1 : index
    %c0_62 = arith.constant 0 : index
    %c0_63 = arith.constant 0 : index
    %80 = vector.load %arg6[%c0_60, %c1_61, %c0_62, %c0_63] : memref<1x4x1x128xf32, #tpu.memory_space<vmem>>, vector<1x1x1x128xf32>
    %81 = vector.shape_cast %80 : vector<1x1x1x128xf32> to vector<1x128xf32>
    %82 = vector.shape_cast %79 : vector<1x128xf32> to vector<1x1x1x128xf32>
    tpu.vector_store %arg6[%c0_60, %c1_61, %c0_62, %c0_63], %82 {strides = array<i32>} : memref<1x4x1x128xf32, #tpu.memory_space<vmem>>, vector<1x1x1x128xf32>,
    %83 = vector.extract_strided_slice %16 {offsets = [2, 0, 0], sizes = [1, 2, 128], strides = [1, 1, 1]} : vector<4x2x128xf32> to vector<1x2x128xf32>
    %84 = vector.shape_cast %83 : vector<1x2x128xf32> to vector<2x128xf32>
    %c2_i32 = arith.constant 2 : i32
    %85 = vector.broadcast %c2_i32 : i32 to vector<2x128xi32>
    %86 = arith.cmpi eq, %6, %85 : vector<2x128xi32>
    %87 = arith.mulf %84, %84 : vector<2x128xf32>
    %c0_64 = arith.constant 0 : index
    %c2 = arith.constant 2 : index
    %c0_65 = arith.constant 0 : index
    %c0_66 = arith.constant 0 : index
    %88 = vector.load %arg4[%c0_64, %c2, %c0_65, %c0_66] : memref<1x4x1x128xf32, #tpu.memory_space<vmem>>, vector<1x1x1x128xf32>
    %89 = vector.shape_cast %88 : vector<1x1x1x128xf32> to vector<1x128xf32>
    %cst_67 = arith.constant 0.000000e+00 : f32
    %90 = vector.broadcast %cst_67 : f32 to vector<2x128xf32>
    %91 = arith.select %86, %84, %90 : vector<2x128xi1>, vector<2x128xf32>
    %cst_68 = arith.constant dense<0.000000e+00> : vector<128xf32>
    %92 = vector.multi_reduction <add>, %91, %cst_68 [0] : vector<2x128xf32> to vector<128xf32>
    %93 = vector.shape_cast %92 : vector<128xf32> to vector<1x128xf32>
    %94 = arith.addf %89, %93 : vector<1x128xf32>
    %c0_69 = arith.constant 0 : index
    %c2_70 = arith.constant 2 : index
    %c0_71 = arith.constant 0 : index
    %c0_72 = arith.constant 0 : index
    %95 = vector.load %arg4[%c0_69, %c2_70, %c0_71, %c0_72] : memref<1x4x1x128xf32, #tpu.memory_space<vmem>>, vector<1x1x1x128xf32>
    %96 = vector.shape_cast %95 : vector<1x1x1x128xf32> to vector<1x128xf32>
    %97 = vector.shape_cast %94 : vector<1x128xf32> to vector<1x1x1x128xf32>
    tpu.vector_store %arg4[%c0_69, %c2_70, %c0_71, %c0_72], %97 {strides = array<i32>} : memref<1x4x1x128xf32, #tpu.memory_space<vmem>>, vector<1x1x1x128xf32>,
    %c0_73 = arith.constant 0 : index
    %c2_74 = arith.constant 2 : index
    %c0_75 = arith.constant 0 : index
    %c0_76 = arith.constant 0 : index
    %98 = vector.load %arg5[%c0_73, %c2_74, %c0_75, %c0_76] : memref<1x4x1x128xf32, #tpu.memory_space<vmem>>, vector<1x1x1x128xf32>
    %99 = vector.shape_cast %98 : vector<1x1x1x128xf32> to vector<1x128xf32>
    %100 = arith.extui %86 : vector<2x128xi1> to vector<2x128xi32>
    %101 = arith.sitofp %100 : vector<2x128xi32> to vector<2x128xf32>
    %cst_77 = arith.constant dense<0.000000e+00> : vector<128xf32>
    %102 = vector.multi_reduction <add>, %101, %cst_77 [0] : vector<2x128xf32> to vector<128xf32>
    %103 = vector.shape_cast %102 : vector<128xf32> to vector<1x128xf32>
    %104 = arith.addf %99, %103 : vector<1x128xf32>
    %c0_78 = arith.constant 0 : index
    %c2_79 = arith.constant 2 : index
    %c0_80 = arith.constant 0 : index
    %c0_81 = arith.constant 0 : index
    %105 = vector.load %arg5[%c0_78, %c2_79, %c0_80, %c0_81] : memref<1x4x1x128xf32, #tpu.memory_space<vmem>>, vector<1x1x1x128xf32>
    %106 = vector.shape_cast %105 : vector<1x1x1x128xf32> to vector<1x128xf32>
    %107 = vector.shape_cast %104 : vector<1x128xf32> to vector<1x1x1x128xf32>
    tpu.vector_store %arg5[%c0_78, %c2_79, %c0_80, %c0_81], %107 {strides = array<i32>} : memref<1x4x1x128xf32, #tpu.memory_space<vmem>>, vector<1x1x1x128xf32>,
    %c0_82 = arith.constant 0 : index
    %c2_83 = arith.constant 2 : index
    %c0_84 = arith.constant 0 : index
    %c0_85 = arith.constant 0 : index
    %108 = vector.load %arg6[%c0_82, %c2_83, %c0_84, %c0_85] : memref<1x4x1x128xf32, #tpu.memory_space<vmem>>, vector<1x1x1x128xf32>
    %109 = vector.shape_cast %108 : vector<1x1x1x128xf32> to vector<1x128xf32>
    %cst_86 = arith.constant dense<0.000000e+00> : vector<128xf32>
    %110 = vector.multi_reduction <add>, %87, %cst_86 [0] : vector<2x128xf32> to vector<128xf32>
    %111 = vector.shape_cast %110 : vector<128xf32> to vector<1x128xf32>
    %112 = arith.addf %109, %111 : vector<1x128xf32>
    %c0_87 = arith.constant 0 : index
    %c2_88 = arith.constant 2 : index
    %c0_89 = arith.constant 0 : index
    %c0_90 = arith.constant 0 : index
    %113 = vector.load %arg6[%c0_87, %c2_88, %c0_89, %c0_90] : memref<1x4x1x128xf32, #tpu.memory_space<vmem>>, vector<1x1x1x128xf32>
    %114 = vector.shape_cast %113 : vector<1x1x1x128xf32> to vector<1x128xf32>
    %115 = vector.shape_cast %112 : vector<1x128xf32> to vector<1x1x1x128xf32>
    tpu.vector_store %arg6[%c0_87, %c2_88, %c0_89, %c0_90], %115 {strides = array<i32>} : memref<1x4x1x128xf32, #tpu.memory_space<vmem>>, vector<1x1x1x128xf32>,
    %116 = vector.extract_strided_slice %16 {offsets = [3, 0, 0], sizes = [1, 2, 128], strides = [1, 1, 1]} : vector<4x2x128xf32> to vector<1x2x128xf32>
    %117 = vector.shape_cast %116 : vector<1x2x128xf32> to vector<2x128xf32>
    %c3_i32 = arith.constant 3 : i32
    %118 = vector.broadcast %c3_i32 : i32 to vector<2x128xi32>
    %119 = arith.cmpi eq, %6, %118 : vector<2x128xi32>
    %120 = arith.mulf %117, %117 : vector<2x128xf32>
    %c0_91 = arith.constant 0 : index
    %c3 = arith.constant 3 : index
    %c0_92 = arith.constant 0 : index
    %c0_93 = arith.constant 0 : index
    %121 = vector.load %arg4[%c0_91, %c3, %c0_92, %c0_93] : memref<1x4x1x128xf32, #tpu.memory_space<vmem>>, vector<1x1x1x128xf32>
    %122 = vector.shape_cast %121 : vector<1x1x1x128xf32> to vector<1x128xf32>
    %cst_94 = arith.constant 0.000000e+00 : f32
    %123 = vector.broadcast %cst_94 : f32 to vector<2x128xf32>
    %124 = arith.select %119, %117, %123 : vector<2x128xi1>, vector<2x128xf32>
    %cst_95 = arith.constant dense<0.000000e+00> : vector<128xf32>
    %125 = vector.multi_reduction <add>, %124, %cst_95 [0] : vector<2x128xf32> to vector<128xf32>
    %126 = vector.shape_cast %125 : vector<128xf32> to vector<1x128xf32>
    %127 = arith.addf %122, %126 : vector<1x128xf32>
    %c0_96 = arith.constant 0 : index
    %c3_97 = arith.constant 3 : index
    %c0_98 = arith.constant 0 : index
    %c0_99 = arith.constant 0 : index
    %128 = vector.load %arg4[%c0_96, %c3_97, %c0_98, %c0_99] : memref<1x4x1x128xf32, #tpu.memory_space<vmem>>, vector<1x1x1x128xf32>
    %129 = vector.shape_cast %128 : vector<1x1x1x128xf32> to vector<1x128xf32>
    %130 = vector.shape_cast %127 : vector<1x128xf32> to vector<1x1x1x128xf32>
    tpu.vector_store %arg4[%c0_96, %c3_97, %c0_98, %c0_99], %130 {strides = array<i32>} : memref<1x4x1x128xf32, #tpu.memory_space<vmem>>, vector<1x1x1x128xf32>,
    %c0_100 = arith.constant 0 : index
    %c3_101 = arith.constant 3 : index
    %c0_102 = arith.constant 0 : index
    %c0_103 = arith.constant 0 : index
    %131 = vector.load %arg5[%c0_100, %c3_101, %c0_102, %c0_103] : memref<1x4x1x128xf32, #tpu.memory_space<vmem>>, vector<1x1x1x128xf32>
    %132 = vector.shape_cast %131 : vector<1x1x1x128xf32> to vector<1x128xf32>
    %133 = arith.extui %119 : vector<2x128xi1> to vector<2x128xi32>
    %134 = arith.sitofp %133 : vector<2x128xi32> to vector<2x128xf32>
    %cst_104 = arith.constant dense<0.000000e+00> : vector<128xf32>
    %135 = vector.multi_reduction <add>, %134, %cst_104 [0] : vector<2x128xf32> to vector<128xf32>
    %136 = vector.shape_cast %135 : vector<128xf32> to vector<1x128xf32>
    %137 = arith.addf %132, %136 : vector<1x128xf32>
    %c0_105 = arith.constant 0 : index
    %c3_106 = arith.constant 3 : index
    %c0_107 = arith.constant 0 : index
    %c0_108 = arith.constant 0 : index
    %138 = vector.load %arg5[%c0_105, %c3_106, %c0_107, %c0_108] : memref<1x4x1x128xf32, #tpu.memory_space<vmem>>, vector<1x1x1x128xf32>
    %139 = vector.shape_cast %138 : vector<1x1x1x128xf32> to vector<1x128xf32>
    %140 = vector.shape_cast %137 : vector<1x128xf32> to vector<1x1x1x128xf32>
    tpu.vector_store %arg5[%c0_105, %c3_106, %c0_107, %c0_108], %140 {strides = array<i32>} : memref<1x4x1x128xf32, #tpu.memory_space<vmem>>, vector<1x1x1x128xf32>,
    %c0_109 = arith.constant 0 : index
    %c3_110 = arith.constant 3 : index
    %c0_111 = arith.constant 0 : index
    %c0_112 = arith.constant 0 : index
    %141 = vector.load %arg6[%c0_109, %c3_110, %c0_111, %c0_112] : memref<1x4x1x128xf32, #tpu.memory_space<vmem>>, vector<1x1x1x128xf32>
    %142 = vector.shape_cast %141 : vector<1x1x1x128xf32> to vector<1x128xf32>
    %cst_113 = arith.constant dense<0.000000e+00> : vector<128xf32>
    %143 = vector.multi_reduction <add>, %120, %cst_113 [0] : vector<2x128xf32> to vector<128xf32>
    %144 = vector.shape_cast %143 : vector<128xf32> to vector<1x128xf32>
    %145 = arith.addf %142, %144 : vector<1x128xf32>
    %c0_114 = arith.constant 0 : index
    %c3_115 = arith.constant 3 : index
    %c0_116 = arith.constant 0 : index
    %c0_117 = arith.constant 0 : index
    %146 = vector.load %arg6[%c0_114, %c3_115, %c0_116, %c0_117] : memref<1x4x1x128xf32, #tpu.memory_space<vmem>>, vector<1x1x1x128xf32>
    %147 = vector.shape_cast %146 : vector<1x1x1x128xf32> to vector<1x128xf32>
    %148 = vector.shape_cast %145 : vector<1x128xf32> to vector<1x1x1x128xf32>
    tpu.vector_store %arg6[%c0_114, %c3_115, %c0_116, %c0_117], %148 {strides = array<i32>} : memref<1x4x1x128xf32, #tpu.memory_space<vmem>>, vector<1x1x1x128xf32>,
    return
  }
  func.func @transform_0(%arg0: i32, %arg1: i32) -> (i32, i32, i32, i32) {
    %c0_i32 = arith.constant 0 : i32
    %c0_i32_0 = arith.constant 0 : i32
    %c0_i32_1 = arith.constant 0 : i32
    return %arg0, %c0_i32, %arg1, %c0_i32_0 : i32, i32, i32, i32
  }
  func.func @transform_1(%arg0: i32, %arg1: i32) -> (i32, i32, i32) {
    %c0_i32 = arith.constant 0 : i32
    %c0_i32_0 = arith.constant 0 : i32
    return %arg0, %arg1, %c0_i32 : i32, i32, i32
  }
  func.func @transform_2(%arg0: i32, %arg1: i32) -> (i32, i32, i32, i32) {
    %c0_i32 = arith.constant 0 : i32
    %c0_i32_0 = arith.constant 0 : i32
    %c0_i32_1 = arith.constant 0 : i32
    %c0_i32_2 = arith.constant 0 : i32
    return %arg0, %c0_i32, %c0_i32_0, %c0_i32_1 : i32, i32, i32, i32
  }
  func.func @transform_3(%arg0: i32, %arg1: i32) -> (i32, i32, i32, i32) {
    %c0_i32 = arith.constant 0 : i32
    %c0_i32_0 = arith.constant 0 : i32
    %c0_i32_1 = arith.constant 0 : i32
    %c0_i32_2 = arith.constant 0 : i32
    return %arg0, %c0_i32, %c0_i32_0, %c0_i32_1 : i32, i32, i32, i32
  }
  func.func @transform_4(%arg0: i32, %arg1: i32) -> (i32, i32, i32, i32) {
    %c0_i32 = arith.constant 0 : i32
    %c0_i32_0 = arith.constant 0 : i32
    %c0_i32_1 = arith.constant 0 : i32
    %c0_i32_2 = arith.constant 0 : i32
    return %arg0, %c0_i32, %c0_i32_0, %c0_i32_1 : i32, i32, i32, i32
  }
}

</mosaic_0001>

<llo_original>
// kernel: tpu_custom_call.1
$region0: #{tpu_custom_call.1}
  #allocation0 [shape = 'u32[]', space=smem, size = 0x4, offset = 0x4, fixed_abs, tag = 'smem constant byte address 0x4 - core index']
  #allocation1 [shape = 'u32[144,128]{1,0:T(1,128)}', space=vmem, size = 0x12000, scoped, tag = 'internal scratch']
  %s0 = inlined_call_operand.hbm [shape: f32[2,4,2,128], index: 0, kind: input, shape index: {}]
  %s1 = inlined_call_operand.hbm [shape: s32[2,2,128], index: 1, kind: input, shape index: {}]
  %s2 = inlined_call_operand.hbm [shape: f32[2,4,1,128], index: 2, kind: output, shape index: {0}]
  %s3 = inlined_call_operand.hbm [shape: f32[2,4,1,128], index: 3, kind: output, shape index: {1}]
  %s4 = inlined_call_operand.hbm [shape: f32[2,4,1,128], index: 4, kind: output, shape index: {2}]
  %5 = xla_tuple %s2, %s3, %s4
  %s6 = sld [smem:[#allocation0]]
  $region69: #{tpu_custom_call.1} parent=0
    _
  %s8 = ssub.s32 1, %s6
  %s9 = scalar_select 0, %s8, %s6
  $region1: #{tpu_custom_call.1} parent=0
    #allocation2 [shape = 'u8[8192]{0}', space=vmem, size = 0x2000, scoped, tag = 'input window, operand 0']
    #allocation3 [shape = 's32[2]{0}', space=sflag, size = 0x8, scoped, tag = 'scoped memory for tpu_custom_call.1']
    #allocation4 [shape = 's32[2]{0}', space=sflag, size = 0x8, scoped, tag = 'scoped memory for tpu_custom_call.1']
    #allocation5 [shape = 'u8[2048]{0}', space=vmem, size = 0x800, scoped, tag = 'input window, operand 1']
    #allocation6 [shape = 's32[2]{0}', space=sflag, size = 0x8, scoped, tag = 'scoped memory for tpu_custom_call.1']
    #allocation7 [shape = 'u8[4096]{0}', space=vmem, size = 0x1000, scoped, tag = 'output window, operand 0']
    #allocation8 [shape = 'u8[4096]{0}', space=vmem, size = 0x1000, scoped, tag = 'output window, operand 1']
    #allocation9 [shape = 's32[2]{0}', space=sflag, size = 0x8, scoped, tag = 'scoped memory for tpu_custom_call.1']
    #allocation10 [shape = 'u8[4096]{0}', space=vmem, size = 0x1000, scoped, tag = 'output window, operand 2']
    %10 = vsyncpa [#allocation3], 0
    %s11 = scalar_lea.sflag [#allocation3], 1
    %12 = vsyncpa %s11, 0
    %13 = vsyncpa [#allocation6], 0
    %s14 = scalar_lea.sflag [#allocation6], 1
    %15 = vsyncpa %s14, 0
    %16 = vsyncpa [#allocation4], 0
    %s17 = scalar_lea.sflag [#allocation4], 1
    %18 = vsyncpa %s17, 0
    %19 = vsyncpa [#allocation9], 0
    %s20 = scalar_lea.sflag [#allocation9], 1
    %21 = vsyncpa %s20, 0
    loop: start=0, step=1, limit=4
    $region2: #{tpu_custom_call.1} parent=1 // loop_pre_header
      _
    $region3: #{tpu_custom_call.1} parent=1 // loop_header
      %s23 = sphi 0, %s27
      %p24 = scmp.ge.s32.totalorder %s23, 4
      %s30 = sphi 0, %s42
      %s31 = sphi 0, %s38
      %s32 = sphi 0, %s30
      %s33 = sphi 0, %s31
      %s34 = sphi 0, %s32
      %s35 = sphi 0, %s33
      %s47 = sphi 0, %s49
      %s50 = sphi 0, %s47
      %s51 = sphi 0, %s50
      %s67 = sphi 0, %s51
      %s75 = sphi 0, %s77
      %s78 = sphi 0, %s75
      %s79 = sphi 0, %s78
      %s95 = sphi 0, %s79
      %s101 = sphi 0, %s103
      %s104 = sphi 0, %s101
      %s105 = sphi 0, %s104
      %s121 = sphi 0, %s105
      %s127 = sphi 0, %s129
      %s130 = sphi 0, %s127
      %s131 = sphi 0, %s130
      %s147 = sphi 0, %s131
      %s153 = sphi 0, %s155
      %s156 = sphi 0, %s153
      %s157 = sphi 0, %s156
      %s173 = sphi 0, %s157
    $region4: #{tpu_custom_call.1} parent=1 // loop_header_branch
      %26 = sbr.rel (%p24) target = $region8
    $region5: #{tpu_custom_call.1} parent=1 // loop_body
      %s28 = ssub.s32 %s23, 1
      %s29 = ssub.s32 %s23, 2
      %s36 = sadd.s32 1, %s31
      %p37 = scmp.ge.s32.totalorder %s36, 1
      %s38 = scalar_select %p37, 0, %s36
      %s39 = sadd.s32 1, %s30
      %s40 = scalar_select %p37, %s39, %s30
      %p41 = scmp.ge.s32.totalorder %s40, 2
      %s42 = scalar_select %p41, 0, %s40
      %s43 = ssub.s32 %s30, %s42
      %s44 = ssub.s32 %s31, %s38
      %s45 = sor.u32 %s43, %s44
      %p46 = scmp.eq.s32.totalorder %s45, 0
      %s48 = sadd.s32 %s47, 1
      %s49 = scalar_select %p46, %s47, %s48
      %p52 = pneg %p46
      %p53 = scmp.eq.s32.totalorder %s23, 1
      %p54 = por %p52, %p53
      %p55 = scmp.ne.s32.totalorder %s47, %s50
      %p56 = scmp.eq.s32.totalorder %s23, 0
      %p57 = por %p55, %p56
      %p58 = scmp.ne.s32.totalorder %s47, %s50
      %p59 = scmp.eq.s32.totalorder %s28, 1
      %p60 = por %p58, %p59
      %p61 = scmp.ne.s32.totalorder %s50, %s51
      %p62 = scmp.eq.s32.totalorder %s28, 0
      %p63 = por %p61, %p62
      %p64 = scmp.ne.s32.totalorder %s50, %s51
      %p65 = scmp.eq.s32.totalorder %s29, 1
      %p66 = por %p64, %p65
      %p68 = scmp.ne.s32.totalorder %s51, %s67
      %p69 = scmp.eq.s32.totalorder %s29, 0
      %p70 = por %p68, %p69
      %s71 = ssub.s32 %s30, %s42
      %s72 = ssub.s32 %s31, %s38
      %s73 = sor.u32 %s71, %s72
      %p74 = scmp.eq.s32.totalorder %s73, 0
      %s76 = sadd.s32 %s75, 1
      %s77 = scalar_select %p74, %s75, %s76
      %p80 = pneg %p74
      %p81 = scmp.eq.s32.totalorder %s23, 1
      %p82 = por %p80, %p81
      %p83 = scmp.ne.s32.totalorder %s75, %s78
      %p84 = scmp.eq.s32.totalorder %s23, 0
      %p85 = por %p83, %p84
      %p86 = scmp.ne.s32.totalorder %s75, %s78
      %p87 = scmp.eq.s32.totalorder %s28, 1
      %p88 = por %p86, %p87
      %p89 = scmp.ne.s32.totalorder %s78, %s79
      %p90 = scmp.eq.s32.totalorder %s28, 0
      %p91 = por %p89, %p90
      %p92 = scmp.ne.s32.totalorder %s78, %s79
      %p93 = scmp.eq.s32.totalorder %s29, 1
      %p94 = por %p92, %p93
      %p96 = scmp.ne.s32.totalorder %s79, %s95
      %p97 = scmp.eq.s32.totalorder %s29, 0
      %p98 = por %p96, %p97
      %s99 = ssub.s32 %s30, %s42
      %p100 = scmp.eq.s32.totalorder %s99, 0
      %s102 = sadd.s32 %s101, 1
      %s103 = scalar_select %p100, %s101, %s102
      %p106 = pneg %p100
      %p107 = scmp.eq.s32.totalorder %s23, 1
      %p108 = por %p106, %p107
      %p109 = scmp.ne.s32.totalorder %s101, %s104
      %p110 = scmp.eq.s32.totalorder %s23, 0
      %p111 = por %p109, %p110
      %p112 = scmp.ne.s32.totalorder %s101, %s104
      %p113 = scmp.eq.s32.totalorder %s28, 1
      %p114 = por %p112, %p113
      %p115 = scmp.ne.s32.totalorder %s104, %s105
      %p116 = scmp.eq.s32.totalorder %s28, 0
      %p117 = por %p115, %p116
      %p118 = scmp.ne.s32.totalorder %s104, %s105
      %p119 = scmp.eq.s32.totalorder %s29, 1
      %p120 = por %p118, %p119
      %p122 = scmp.ne.s32.totalorder %s105, %s121
      %p123 = scmp.eq.s32.totalorder %s29, 0
      %p124 = por %p122, %p123
      %s125 = ssub.s32 %s30, %s42
      %p126 = scmp.eq.s32.totalorder %s125, 0
      %s128 = sadd.s32 %s127, 1
      %s129 = scalar_select %p126, %s127, %s128
      %p132 = pneg %p126
      %p133 = scmp.eq.s32.totalorder %s23, 1
      %p134 = por %p132, %p133
      %p135 = scmp.ne.s32.totalorder %s127, %s130
      %p136 = scmp.eq.s32.totalorder %s23, 0
      %p137 = por %p135, %p136
      %p138 = scmp.ne.s32.totalorder %s127, %s130
      %p139 = scmp.eq.s32.totalorder %s28, 1
      %p140 = por %p138, %p139
      %p141 = scmp.ne.s32.totalorder %s130, %s131
      %p142 = scmp.eq.s32.totalorder %s28, 0
      %p143 = por %p141, %p142
      %p144 = scmp.ne.s32.totalorder %s130, %s131
      %p145 = scmp.eq.s32.totalorder %s29, 1
      %p146 = por %p144, %p145
      %p148 = scmp.ne.s32.totalorder %s131, %s147
      %p149 = scmp.eq.s32.totalorder %s29, 0
      %p150 = por %p148, %p149
      %s151 = ssub.s32 %s30, %s42
      %p152 = scmp.eq.s32.totalorder %s151, 0
      %s154 = sadd.s32 %s153, 1
      %s155 = scalar_select %p152, %s153, %s154
      %p158 = pneg %p152
      %p159 = scmp.eq.s32.totalorder %s23, 1
      %p160 = por %p158, %p159
      %p161 = scmp.ne.s32.totalorder %s153, %s156
      %p162 = scmp.eq.s32.totalorder %s23, 0
      %p163 = por %p161, %p162
      %p164 = scmp.ne.s32.totalorder %s153, %s156
      %p165 = scmp.eq.s32.totalorder %s28, 1
      %p166 = por %p164, %p165
      %p167 = scmp.ne.s32.totalorder %s156, %s157
      %p168 = scmp.eq.s32.totalorder %s28, 0
      %p169 = por %p167, %p168
      %p170 = scmp.ne.s32.totalorder %s156, %s157
      %p171 = scmp.eq.s32.totalorder %s29, 1
      %p172 = por %p170, %p171
      %p174 = scmp.ne.s32.totalorder %s157, %s173
      %p175 = scmp.eq.s32.totalorder %s29, 0
      %p176 = por %p174, %p175
      %p177 = scmp.le.s32.totalorder 1, %s23
      %p178 = scmp.lt.s32.totalorder %s23, 3
      %p179 = pnand %p177, %p178
      %p180 = pneg %p179
      // Predicated region
      $region9: #{tpu_custom_call.1} parent=5 // pred_check
        _
      $region10: #{tpu_custom_call.1} parent=5 // pred_check_branch
        %182 = sbr.rel (%p179) target = $region12
      $region11: #{tpu_custom_call.1} parent=5 // pred_region
        %s183 = ssub.s32 %s23, 1
      $region12: #{tpu_custom_call.1} parent=5 // pred_fallthru
        _
      %p184 = scmp.lt.s32.totalorder %s23, 2
      // Predicated region
      $region13: #{tpu_custom_call.1} parent=5 // pred_check
        %p185 = pneg %p184
      $region14: #{tpu_custom_call.1} parent=5 // pred_check_branch
        %187 = sbr.rel (%p185) target = $region16
      $region15: #{tpu_custom_call.1} parent=5 // pred_region
        // Predicated region
        $region17: #{tpu_custom_call.1} parent=15 // pred_check
          %p188 = pneg %p57
        $region18: #{tpu_custom_call.1} parent=15 // pred_check_branch
          %190 = sbr.rel (%p188) target = $region20
        $region19: #{tpu_custom_call.1} parent=15 // pred_region
          %s191 = sand.u32 %s47, 1
          %s192 = scalar_lea.sflag [#allocation3], %s191
          %s193 = sand.u32 %s47, 1
          %s194 = smul.addr %s193, 8
          %s195 = scalar_lea.vmem [#allocation2], %s194
          %s197 = ssub.s32 128, 128
          %198 = vsyncadd %s192, %s197
          %s199 = smul.addr %s30, 4
          %s200 = sadd.s32 %s31, %s199
          %s201 = smul.addr %s200, 32
          %s202 = scalar_lea.hbm %s0, %s201
          %s203 = sshll.u32 %s195, 4
          %s204 = int_to_ptr.vmem [resolvable:$true] %s203
          %209 = dma.hbm_to_vmem [thread:$0]  %s202, 128, %s204, %s192, 32, 32, 2
        $region20: #{tpu_custom_call.1} parent=15 // pred_fallthru
          _
        // Predicated region
        $region21: #{tpu_custom_call.1} parent=15 // pred_check
          %p210 = pneg %p85
        $region22: #{tpu_custom_call.1} parent=15 // pred_check_branch
          %212 = sbr.rel (%p210) target = $region24
        $region23: #{tpu_custom_call.1} parent=15 // pred_region
          %s213 = sand.u32 %s75, 1
          %s214 = scalar_lea.sflag [#allocation6], %s213
          %s215 = sand.u32 %s75, 1
          %s216 = smul.addr %s215, 2
          %s217 = scalar_lea.vmem [#allocation5], %s216
          %s219 = ssub.s32 32, 32
          %220 = vsyncadd %s214, %s219
          %s221 = sadd.s32 %s31, %s30
          %s222 = smul.addr %s221, 32
          %s223 = scalar_lea.hbm %s1, %s222
          %s225 = sshll.u32 %s217, 4
          %s226 = int_to_ptr.vmem [resolvable:$true] %s225
          %228 = dma.hbm_to_vmem [thread:$0]  %s223, 32, %s226, %s214
        $region24: #{tpu_custom_call.1} parent=15 // pred_fallthru
          _
      $region16: #{tpu_custom_call.1} parent=5 // pred_fallthru
        _
      %p229 = scmp.le.s32.totalorder 1, %s23
      %p230 = scmp.lt.s32.totalorder %s23, 3
      %p231 = pnand %p229, %p230
      %p232 = pneg %p231
      // Predicated region
      $region25: #{tpu_custom_call.1} parent=5 // pred_check
        _
      $region26: #{tpu_custom_call.1} parent=5 // pred_check_branch
        %234 = sbr.rel (%p231) target = $region28
      $region27: #{tpu_custom_call.1} parent=5 // pred_region
        %s235 = ssub.s32 %s23, 1
        %s236 = sand.u32 %s50, 1
        %s237 = scalar_lea.sflag [#allocation3], %s236
        %s238 = sand.u32 %s50, 1
        %s239 = smul.addr %s238, 8
        %s240 = scalar_lea.vmem [#allocation2], %s239
        // Predicated region
        $region29: #{tpu_custom_call.1} parent=27 // pred_check
          %p241 = pneg %p63
        $region30: #{tpu_custom_call.1} parent=27 // pred_check_branch
          %243 = sbr.rel (%p241) target = $region32
        $region31: #{tpu_custom_call.1} parent=27 // pred_region
          %244 = dma.done %s237, 128
        $region32: #{tpu_custom_call.1} parent=27 // pred_fallthru
          _
        %s245 = sand.u32 %s78, 1
        %s246 = scalar_lea.sflag [#allocation6], %s245
        %s247 = sand.u32 %s78, 1
        %s248 = smul.addr %s247, 2
        %s249 = scalar_lea.vmem [#allocation5], %s248
        // Predicated region
        $region33: #{tpu_custom_call.1} parent=27 // pred_check
          %p250 = pneg %p91
        $region34: #{tpu_custom_call.1} parent=27 // pred_check_branch
          %252 = sbr.rel (%p250) target = $region36
        $region35: #{tpu_custom_call.1} parent=27 // pred_region
          %253 = dma.done %s246, 32
        $region36: #{tpu_custom_call.1} parent=27 // pred_fallthru
          _
        %s254 = sand.u32 %s50, 1
        %s255 = scalar_lea.sflag [#allocation3], %s254
        %s256 = sand.u32 %s50, 1
        %s257 = smul.addr %s256, 8
        %s258 = scalar_lea.vmem [#allocation2], %s257
        %p259 = pneg %p63
        %p260 = pneg %p60
        %s261 = sand.u32 %s78, 1
        %s262 = scalar_lea.sflag [#allocation6], %s261
        %s263 = sand.u32 %s78, 1
        %s264 = smul.addr %s263, 2
        %s265 = scalar_lea.vmem [#allocation5], %s264
        %p266 = pneg %p91
        %p267 = pneg %p88
        %p268 = pneg %p117
        %p269 = pneg %p114
        %s270 = sand.u32 %s104, 1
        %s271 = scalar_lea.sflag [#allocation4], %s270
        %s272 = sand.u32 %s104, 1
        %s273 = smul.addr %s272, 4
        %s274 = scalar_lea.vmem [#allocation7], %s273
        %p275 = pneg %p143
        %p276 = pneg %p140
        %s277 = sand.u32 %s28, 1
        %s278 = scalar_lea.sflag [#allocation9], %s277
        %s279 = sand.u32 %s130, 1
        %s280 = smul.addr %s279, 4
        %s281 = scalar_lea.vmem [#allocation8], %s280
        %p282 = pneg %p169
        %p283 = pneg %p166
        %s284 = sand.u32 %s28, 1
        %s285 = scalar_lea.sflag [#allocation9], %s284
        %s286 = sand.u32 %s156, 1
        %s287 = smul.addr %s286, 4
        %s288 = scalar_lea.vmem [#allocation10], %s287
        %p289 = scmp.eq.s32.totalorder %s33, 0
        // Predicated region
        $region37: #{tpu_custom_call.1} parent=27 // pred_check
          %p290 = pneg %p289
        $region38: #{tpu_custom_call.1} parent=27 // pred_check_branch
          %292 = sbr.rel (%p290) target = $region40
        $region39: #{tpu_custom_call.1} parent=27 // pred_region
          %293 = vst [vmem:[%s274] sm:$0x1] 0.0
          %294 = vst [vmem:[%s274 + $0x1] sm:$0x1] 0.0
          %295 = vst [vmem:[%s274 + $0x2] sm:$0x1] 0.0
          %296 = vst [vmem:[%s274 + $0x3] sm:$0x1] 0.0
          %297 = vst [vmem:[%s281] sm:$0x1] 0.0
          %298 = vst [vmem:[%s281 + $0x1] sm:$0x1] 0.0
          %299 = vst [vmem:[%s281 + $0x2] sm:$0x1] 0.0
          %300 = vst [vmem:[%s281 + $0x3] sm:$0x1] 0.0
          %301 = vst [vmem:[%s288] sm:$0x1] 0.0
          %302 = vst [vmem:[%s288 + $0x1] sm:$0x1] 0.0
          %303 = vst [vmem:[%s288 + $0x2] sm:$0x1] 0.0
          %304 = vst [vmem:[%s288 + $0x3] sm:$0x1] 0.0
        $region40: #{tpu_custom_call.1} parent=27 // pred_fallthru
          _
        %v305 = vld [vmem:[%s240] sm:$0x3]
        %v306 = vld [vmem:[%s240 + $0x2] sm:$0x3]
        %v307 = vld [vmem:[%s240 + $0x4] sm:$0x3]
        %v308 = vld [vmem:[%s240 + $0x6] sm:$0x3]
        %v309 = vld [vmem:[%s249] sm:$0x3]
        %vm310 = vcmask 1041408
        %v311 = vsel %vm310, %v305, -inf
        %v312 = vsel %vm310, %v306, -inf
        %v313 = vsel %vm310, %v307, -inf
        %v314 = vsel %vm310, %v308, -inf
        %v315 = vmax.f32 %v311, %v312
        %v316 = vmax.f32 %v313, %v314
        %v317 = vmax.f32 %v315, %v316
        %v318 = vsub.f32 %v305, %v317
        %v319 = vsub.f32 %v306, %v317
        %v320 = vsub.f32 %v307, %v317
        %v321 = vsub.f32 %v308, %v317
        %v322 = vmul.f32 %v318, 1.442695
        %v323 = vpow.pop %v322
        %v324 = vmul.f32 %v319, 1.442695
        %v325 = vpow.pop %v324
        %v326 = vmul.f32 %v320, 1.442695
        %v327 = vpow.pop %v326
        %v328 = vmul.f32 %v321, 1.442695
        %v329 = vpow.pop %v328
        %v330 = vsel %vm310, %v323, 0.0
        %v331 = vsel %vm310, %v325, 0.0
        %v332 = vadd.f32 %v330, %v331
        %v333 = vsel %vm310, %v327, 0.0
        %v334 = vadd.f32 %v332, %v333
        %v335 = vsel %vm310, %v329, 0.0
        %v336 = vadd.f32 %v334, %v335
        %v337 = vrcp.pop %v336
        %v338 = vmul.f32 %v323, %v337
        %v339 = vmul.f32 %v325, %v337
        %v340 = vmul.f32 %v327, %v337
        %v341 = vmul.f32 %v329, %v337
        %vm342 = vcmp.eq.s32.totalorder %v309, 0
        %v343 = vmul.f32 %v338, %v338
        %v344 = vld [vmem:[%s274] sm:$0x1]
        %v345 = vsel %vm342, %v338, 0.0
        %v346 = vsel %vm310, %v345, 0.0
        %v347 = vrot.slane %v346, 4
        %v348 = vadd.f32 %v346, %v347
        %v349 = vrot.slane %v348, 2
        %v350 = vadd.f32 %v348, %v349
        %v351 = vrot.slane %v350, 1
        %v352 = vadd.f32 %v350, %v351
        %v353 = vadd.f32 %v344, %v352
        %354 = vst [vmem:[%s274] sm:$0x1] %v353
        %v355 = vld [vmem:[%s281] sm:$0x1]
        %v356 = vsel %vm342, 1, 0
        %v357 = vcvt.s32.f32 %v356
        %v358 = vsel %vm310, %v357, 0.0
        %v359 = vrot.slane %v358, 4
        %v360 = vadd.f32 %v358, %v359
        %v361 = vrot.slane %v360, 2
        %v362 = vadd.f32 %v360, %v361
        %v363 = vrot.slane %v362, 1
        %v364 = vadd.f32 %v362, %v363
        %v365 = vadd.f32 %v355, %v364
        %366 = vst [vmem:[%s281] sm:$0x1] %v365
        %v367 = vld [vmem:[%s288] sm:$0x1]
        %v368 = vsel %vm310, %v343, 0.0
        %v369 = vrot.slane %v368, 4
        %v370 = vadd.f32 %v368, %v369
        %v371 = vrot.slane %v370, 2
        %v372 = vadd.f32 %v370, %v371
        %v373 = vrot.slane %v372, 1
        %v374 = vadd.f32 %v372, %v373
        %v375 = vadd.f32 %v367, %v374
        %376 = vst [vmem:[%s288] sm:$0x1] %v375
        %vm377 = vcmp.eq.s32.totalorder %v309, 1
        %v378 = vmul.f32 %v339, %v339
        %s379 = scalar_lea.vmem %s274, 1 [#allocation7]
        %v380 = vld [vmem:[%s379] sm:$0x1]
        %v381 = vsel %vm377, %v339, 0.0
        %v382 = vsel %vm310, %v381, 0.0
        %v383 = vrot.slane %v382, 4
        %v384 = vadd.f32 %v382, %v383
        %v385 = vrot.slane %v384, 2
        %v386 = vadd.f32 %v384, %v385
        %v387 = vrot.slane %v386, 1
        %v388 = vadd.f32 %v386, %v387
        %v389 = vadd.f32 %v380, %v388
        %390 = vst [vmem:[%s379] sm:$0x1] %v389
        %s391 = scalar_lea.vmem %s281, 1 [#allocation8]
        %v392 = vld [vmem:[%s391] sm:$0x1]
        %v393 = vsel %vm377, 1, 0
        %v394 = vcvt.s32.f32 %v393
        %v395 = vsel %vm310, %v394, 0.0
        %v396 = vrot.slane %v395, 4
        %v397 = vadd.f32 %v395, %v396
        %v398 = vrot.slane %v397, 2
        %v399 = vadd.f32 %v397, %v398
        %v400 = vrot.slane %v399, 1
        %v401 = vadd.f32 %v399, %v400
        %v402 = vadd.f32 %v392, %v401
        %403 = vst [vmem:[%s391] sm:$0x1] %v402
        %s404 = scalar_lea.vmem %s288, 1 [#allocation10]
        %v405 = vld [vmem:[%s404] sm:$0x1]
        %v406 = vsel %vm310, %v378, 0.0
        %v407 = vrot.slane %v406, 4
        %v408 = vadd.f32 %v406, %v407
        %v409 = vrot.slane %v408, 2
        %v410 = vadd.f32 %v408, %v409
        %v411 = vrot.slane %v410, 1
        %v412 = vadd.f32 %v410, %v411
        %v413 = vadd.f32 %v405, %v412
        %414 = vst [vmem:[%s404] sm:$0x1] %v413
        %vm415 = vcmp.eq.s32.totalorder %v309, 2
        %v416 = vmul.f32 %v340, %v340
        %s417 = scalar_lea.vmem %s274, 2 [#allocation7]
        %v418 = vld [vmem:[%s417] sm:$0x1]
        %v419 = vsel %vm415, %v340, 0.0
        %v420 = vsel %vm310, %v419, 0.0
        %v421 = vrot.slane %v420, 4
        %v422 = vadd.f32 %v420, %v421
        %v423 = vrot.slane %v422, 2
        %v424 = vadd.f32 %v422, %v423
        %v425 = vrot.slane %v424, 1
        %v426 = vadd.f32 %v424, %v425
        %v427 = vadd.f32 %v418, %v426
        %428 = vst [vmem:[%s417] sm:$0x1] %v427
        %s429 = scalar_lea.vmem %s281, 2 [#allocation8]
        %v430 = vld [vmem:[%s429] sm:$0x1]
        %v431 = vsel %vm415, 1, 0
        %v432 = vcvt.s32.f32 %v431
        %v433 = vsel %vm310, %v432, 0.0
        %v434 = vrot.slane %v433, 4
        %v435 = vadd.f32 %v433, %v434
        %v436 = vrot.slane %v435, 2
        %v437 = vadd.f32 %v435, %v436
        %v438 = vrot.slane %v437, 1
        %v439 = vadd.f32 %v437, %v438
        %v440 = vadd.f32 %v430, %v439
        %441 = vst [vmem:[%s429] sm:$0x1] %v440
        %s442 = scalar_lea.vmem %s288, 2 [#allocation10]
        %v443 = vld [vmem:[%s442] sm:$0x1]
        %v444 = vsel %vm310, %v416, 0.0
        %v445 = vrot.slane %v444, 4
        %v446 = vadd.f32 %v444, %v445
        %v447 = vrot.slane %v446, 2
        %v448 = vadd.f32 %v446, %v447
        %v449 = vrot.slane %v448, 1
        %v450 = vadd.f32 %v448, %v449
        %v451 = vadd.f32 %v443, %v450
        %452 = vst [vmem:[%s442] sm:$0x1] %v451
        %vm453 = vcmp.eq.s32.totalorder %v309, 3
        %v454 = vmul.f32 %v341, %v341
        %s455 = scalar_lea.vmem %s274, 3 [#allocation7]
        %v456 = vld [vmem:[%s455] sm:$0x1]
        %v457 = vsel %vm453, %v341, 0.0
        %v458 = vsel %vm310, %v457, 0.0
        %v459 = vrot.slane %v458, 4
        %v460 = vadd.f32 %v458, %v459
        %v461 = vrot.slane %v460, 2
        %v462 = vadd.f32 %v460, %v461
        %v463 = vrot.slane %v462, 1
        %v464 = vadd.f32 %v462, %v463
        %v465 = vadd.f32 %v456, %v464
        %466 = vst [vmem:[%s455] sm:$0x1] %v465
        %s467 = scalar_lea.vmem %s281, 3 [#allocation8]
        %v468 = vld [vmem:[%s467] sm:$0x1]
        %v469 = vsel %vm453, 1, 0
        %v470 = vcvt.s32.f32 %v469
        %v471 = vsel %vm310, %v470, 0.0
        %v472 = vrot.slane %v471, 4
        %v473 = vadd.f32 %v471, %v472
        %v474 = vrot.slane %v473, 2
        %v475 = vadd.f32 %v473, %v474
        %v476 = vrot.slane %v475, 1
        %v477 = vadd.f32 %v475, %v476
        %v478 = vadd.f32 %v468, %v477
        %479 = vst [vmem:[%s467] sm:$0x1] %v478
        %s480 = scalar_lea.vmem %s288, 3 [#allocation10]
        %v481 = vld [vmem:[%s480] sm:$0x1]
        %v482 = vsel %vm310, %v454, 0.0
        %v483 = vrot.slane %v482, 4
        %v484 = vadd.f32 %v482, %v483
        %v485 = vrot.slane %v484, 2
        %v486 = vadd.f32 %v484, %v485
        %v487 = vrot.slane %v486, 1
        %v488 = vadd.f32 %v486, %v487
        %v489 = vadd.f32 %v481, %v488
        %490 = vst [vmem:[%s480] sm:$0x1] %v489
        %s491 = sand.u32 %s104, 1
        %s492 = scalar_lea.sflag [#allocation4], %s491
        %s493 = sand.u32 %s104, 1
        %s494 = smul.addr %s493, 4
        %s495 = scalar_lea.vmem [#allocation7], %s494
        %s496 = sand.u32 %s28, 1
        %s497 = scalar_lea.sflag [#allocation9], %s496
        %s498 = sand.u32 %s130, 1
        %s499 = smul.addr %s498, 4
        %s500 = scalar_lea.vmem [#allocation8], %s499
        %s501 = sand.u32 %s28, 1
        %s502 = scalar_lea.sflag [#allocation9], %s501
        %s503 = sand.u32 %s156, 1
        %s504 = smul.addr %s503, 4
        %s505 = scalar_lea.vmem [#allocation10], %s504
        // Predicated region
        $region41: #{tpu_custom_call.1} parent=27 // pred_check
          %p506 = pneg %p114
        $region42: #{tpu_custom_call.1} parent=27 // pred_check_branch
          %508 = sbr.rel (%p506) target = $region44
        $region43: #{tpu_custom_call.1} parent=27 // pred_region
          %s510 = ssub.s32 64, 64
          %511 = vsyncadd %s492, %s510
          %s512 = smul.addr %s32, 4
          %s513 = smul.addr %s512, 16
          %s514 = scalar_lea.hbm %s2, %s513
          %s515 = sshll.u32 %s495, 4
          %s516 = int_to_ptr.vmem [resolvable:$true] %s515
          %521 = dma.vmem_to_hbm [thread:$0]  %s516, 64, %s514, %s492, 16, 16, 1
        $region44: #{tpu_custom_call.1} parent=27 // pred_fallthru
          _
        // Predicated region
        $region45: #{tpu_custom_call.1} parent=27 // pred_check
          %p522 = pneg %p140
        $region46: #{tpu_custom_call.1} parent=27 // pred_check_branch
          %524 = sbr.rel (%p522) target = $region48
        $region47: #{tpu_custom_call.1} parent=27 // pred_region
          %s526 = ssub.s32 64, 64
          %527 = vsyncadd %s497, %s526
          %s528 = smul.addr %s32, 4
          %s529 = smul.addr %s528, 16
          %s530 = scalar_lea.hbm %s3, %s529
          %s531 = sshll.u32 %s500, 4
          %s532 = int_to_ptr.vmem [resolvable:$true] %s531
          %537 = dma.vmem_to_hbm [thread:$0]  %s532, 64, %s530, %s497, 16, 16, 1
        $region48: #{tpu_custom_call.1} parent=27 // pred_fallthru
          _
        // Predicated region
        $region49: #{tpu_custom_call.1} parent=27 // pred_check
          %p538 = pneg %p166
        $region50: #{tpu_custom_call.1} parent=27 // pred_check_branch
          %540 = sbr.rel (%p538) target = $region52
        $region51: #{tpu_custom_call.1} parent=27 // pred_region
          %s542 = ssub.s32 64, 64
          %543 = vsyncadd %s502, %s542
          %s544 = smul.addr %s32, 4
          %s545 = smul.addr %s544, 16
          %s546 = scalar_lea.hbm %s4, %s545
          %s547 = sshll.u32 %s505, 4
          %s548 = int_to_ptr.vmem [resolvable:$true] %s547
          %553 = dma.vmem_to_hbm [thread:$0]  %s548, 64, %s546, %s502, 16, 16, 1
        $region52: #{tpu_custom_call.1} parent=27 // pred_fallthru
          _
      $region28: #{tpu_custom_call.1} parent=5 // pred_fallthru
        _
      %p554 = scmp.le.s32.totalorder 2, %s23
      // Predicated region
      $region53: #{tpu_custom_call.1} parent=5 // pred_check
        %p555 = pneg %p554
      $region54: #{tpu_custom_call.1} parent=5 // pred_check_branch
        %557 = sbr.rel (%p555) target = $region56
      $region55: #{tpu_custom_call.1} parent=5 // pred_region
        %s558 = ssub.s32 %s23, 2
        // Predicated region
        $region57: #{tpu_custom_call.1} parent=55 // pred_check
          %p559 = pneg %p120
        $region58: #{tpu_custom_call.1} parent=55 // pred_check_branch
          %561 = sbr.rel (%p559) target = $region60
        $region59: #{tpu_custom_call.1} parent=55 // pred_region
          %s562 = sand.u32 %s105, 1
          %s563 = scalar_lea.sflag [#allocation4], %s562
          %s564 = sand.u32 %s105, 1
          %s565 = smul.addr %s564, 4
          %s566 = scalar_lea.vmem [#allocation7], %s565
          %567 = dma.done %s563, 64
        $region60: #{tpu_custom_call.1} parent=55 // pred_fallthru
          _
        // Predicated region
        $region61: #{tpu_custom_call.1} parent=55 // pred_check
          %p568 = pneg %p146
        $region62: #{tpu_custom_call.1} parent=55 // pred_check_branch
          %570 = sbr.rel (%p568) target = $region64
        $region63: #{tpu_custom_call.1} parent=55 // pred_region
          %s571 = sand.u32 %s29, 1
          %s572 = scalar_lea.sflag [#allocation9], %s571
          %s573 = sand.u32 %s131, 1
          %s574 = smul.addr %s573, 4
          %s575 = scalar_lea.vmem [#allocation8], %s574
          %576 = dma.done %s572, 64
        $region64: #{tpu_custom_call.1} parent=55 // pred_fallthru
          _
        // Predicated region
        $region65: #{tpu_custom_call.1} parent=55 // pred_check
          %p577 = pneg %p172
        $region66: #{tpu_custom_call.1} parent=55 // pred_check_branch
          %579 = sbr.rel (%p577) target = $region68
        $region67: #{tpu_custom_call.1} parent=55 // pred_region
          %s580 = sand.u32 %s29, 1
          %s581 = scalar_lea.sflag [#allocation9], %s580
          %s582 = sand.u32 %s157, 1
          %s583 = smul.addr %s582, 4
          %s584 = scalar_lea.vmem [#allocation10], %s583
          %585 = dma.done %s581, 64
        $region68: #{tpu_custom_call.1} parent=55 // pred_fallthru
          _
      $region56: #{tpu_custom_call.1} parent=5 // pred_fallthru
        _
    $region6: #{tpu_custom_call.1} parent=1 // loop_footer
      %s27 = sadd.s32 1, %s23
    $region7: #{tpu_custom_call.1} parent=1 // loop_footer_branch
      %22 = sbr.rel target = $region3
    $region8: #{tpu_custom_call.1} parent=1 // loop_exit
      _
    %586 = vsyncpa [#allocation3], 1
    %s587 = scalar_lea.sflag [#allocation3], 1
    %588 = vsyncpa %s587, 1
    %589 = vsyncpa [#allocation6], 1
    %s590 = scalar_lea.sflag [#allocation6], 1
    %591 = vsyncpa %s590, 1
    %592 = vsyncpa [#allocation4], 1
    %s593 = scalar_lea.sflag [#allocation4], 1
    %594 = vsyncpa %s593, 1
    %595 = vsyncpa [#allocation9], 1
    %s596 = scalar_lea.sflag [#allocation9], 1
    %597 = vsyncpa %s596, 1

</llo_original>
